<compile_context>
chip_gen: v5e
topology: v5e:2x2
jax: 0.10.0
libtpu: 0.0.40
codegen_flags: <defaults>
</compile_context>

<pallas_src>
import jax
import jax.numpy as jnp
from jax import lax
from jax.experimental import pallas as pl
from jax.experimental.pallas import tpu as pltpu


def _argmax_kernel(a_ref, x_ref, idx_ref):
    # a_ref:   (S, d)       fused posterior-sample coefficients (grid-resident)
    # x_ref:   (Bb, N, d)   candidate block in its native layout (no HBM transpose)
    # idx_ref: (Bb, 1, S)   int32 argmax index per (batch, posterior sample)
    A = a_ref[...]                                    # (S, d) f32
    Xb = x_ref[...]                                   # (Bb, N, d) f32
    Bb, N, d = Xb.shape
    S = A.shape[0]

    # One fused matmul per grid step: obj[b, n, s] = X[b, n, :] . A[s, :].
    # HIGHEST precision: f32 accumulation so near-tie argmax matches an f32 ref.
    obj = lax.dot_general(
        Xb.reshape(Bb * N, d), A,
        (((1,), (1,)), ((), ())),
        preferred_element_type=jnp.float32,
        precision=lax.Precision.HIGHEST,
    ).reshape(Bb, N, S)                               # (Bb, N, S)

    # First-occurrence argmax over the candidate axis N (matches torch.argmax /
    # jnp.argmax tie-breaking): max, equality mask, min-of-iota.
    mx = jnp.max(obj, axis=1, keepdims=True)                     # (Bb, 1, S)
    iota = lax.broadcasted_iota(jnp.int32, (Bb, N, S), 1)
    idx_ref[...] = jnp.min(jnp.where(obj == mx, iota, N),
                           axis=1, keepdims=True)                # (Bb, 1, S) int32


def _round_up(x, m):
    return (x + m - 1) // m * m


def _tpu_vmem_capacity_bytes():
    """Per-core VMEM capacity; conservative (v7x = 64 MiB) fallback."""
    try:
        return int(pltpu.get_tpu_info().vmem_capacity_bytes)
    except Exception:
        return 64 << 20


def _block_vmem_bytes(bb, N, d, S):
    """Padded-(8,128) VMEM footprint of one grid step (double-buffered blocks +
    the obj / iota / compare / select temporaries of the argmax)."""
    lane = lambda v: _round_up(v, 128)
    sub = lambda v: _round_up(v, 8)
    x_blk = bb * sub(N) * lane(d) * 4                 # X input block
    a_blk = sub(S) * lane(d) * 4                      # resident A block
    out_blk = bb * sub(1) * lane(S) * 4               # index output block
    interm = 4 * bb * sub(N) * lane(S) * 4            # obj/iota/mask/select temps
    return 2 * (x_blk + a_blk + out_blk) + interm


def _pick_batch_block(B, N, d, S, budget_bytes):
    divisors = [bb for bb in range(1, B + 1) if B % bb == 0]
    fitting = [bb for bb in divisors if _block_vmem_bytes(bb, N, d, S) <= budget_bytes]
    if not fitting:
        return 1  # best effort; vmem_limit_bytes still bounds the compiler
    best = max(fitting)
    # v7x megacore: if an even number (>=2) of "parallel" steps still leaves
    # each block past the ~85%-of-roofline size (~4 MiB), prefer it; on
    # single-TC v5e/v6e the extra step only costs ~0.35 us.
    for bb in sorted(fitting, reverse=True):
        steps = B // bb
        if steps >= 2 and steps % 2 == 0 and _block_vmem_bytes(bb, N, d, S) >= (4 << 20):
            return bb
    return best


def max_posterior_sampling(X, w_mean, W_feat, eps):
    """X: (B, N, d) f32; w_mean: (d, 1); W_feat: (d, F); eps: (S, F). Returns (B, S, d)."""
    B, N, d = X.shape
    S = eps.shape[0]

    # Algebraic fusion (tiny, done once in the wrapper):
    #   obj[s, b, n] = X[b, n, :] @ (W_feat @ eps[s] + w_mean) = X[b, n, :] @ A[s, :]
    A = (jnp.dot(eps, W_feat.T, precision=lax.Precision.HIGHEST)
         + w_mean.T).astype(jnp.float32)                          # (S, d)

    cap = _tpu_vmem_capacity_bytes()
    vmem_limit = min(cap * 3 // 4, 96 << 20)          # ~48 MiB on v7x, ~96 MiB on v5e/v6e
    budget = min(cap // 2, 48 << 20)                  # ~32 MiB on v7x, ~48 MiB on v5e/v6e

    Bb = _pick_batch_block(B, N, d, S, budget)
    grid = (B // Bb,)

    idcs = pl.pallas_call(
        _argmax_kernel,
        out_shape=jax.ShapeDtypeStruct((B, 1, S), jnp.int32),
        grid=grid,
        in_specs=[
            pl.BlockSpec((S, d), lambda i: (0, 0)),               # constant -> resident
            pl.BlockSpec((Bb, N, d), lambda i: (i, 0, 0)),        # X in native layout
        ],
        out_specs=pl.BlockSpec((Bb, 1, S), lambda i: (i, 0, 0)),  # tiny int32 indices
        compiler_params=pltpu.CompilerParams(
            dimension_semantics=("parallel",),
            vmem_limit_bytes=vmem_limit),
    )(A, X)

    idcs = idcs.reshape(B, S)                                     # (B, S) = permuted torch idcs
    # Bit-exact gather of the selected candidate rows in the wrapper
    # (torch.gather equivalent); avoids a d-wide masked-store kernel output.
    return jnp.take_along_axis(X, idcs[..., None], axis=1)        # (B, S, d)


def _reference(X, w_mean, W_feat, eps):
    """Pure-JAX reference mirroring the PyTorch forward (replacement=True)."""
    mean = jnp.einsum("bnd,do->bn", X, w_mean)                    # (B, N)
    Phi = jnp.einsum("bnd,df->bnf", X, W_feat)                    # (B, N, F)
    obj = jnp.einsum("sf,bnf->sbn", eps, Phi) + mean[None]        # (S, B, N)
    idcs = jnp.argmax(obj, axis=-1)                               # (S, B)
    idcs = jnp.transpose(idcs, (1, 0))                            # (B, S)  (permute step)
    return jnp.take_along_axis(X, idcs[..., None], axis=1)        # (B, S, d) (gather step)


if __name__ == "__main__":
    B, N, d, S, F = 2, 128, 8, 8, 16

    key = jax.random.PRNGKey(0)
    kx, kw, kf, ke = jax.random.split(key, 4)
    X = jax.random.uniform(kx, (B, N, d), dtype=jnp.float32)          # candidate set in [0,1]^d
    w_mean = jax.random.normal(kw, (d, 1), dtype=jnp.float32)         # synthetic posterior mean weights
    W_feat = jax.random.normal(kf, (d, F), dtype=jnp.float32) * 0.5   # random-feature projection
    eps = jax.random.normal(ke, (S, F), dtype=jnp.float32)            # posterior sample draws

    out = max_posterior_sampling(X, w_mean, W_feat, eps)
    out = jax.block_until_ready(out)

    ref = _reference(X, w_mean, W_feat, eps)
    assert out.shape == (B, S, d)
    # Both paths return exact copies of rows of X; with random (tie-free) inputs
    # the argmax indices agree, so the gathered rows match exactly.
    assert jnp.allclose(out, ref, atol=1e-5, rtol=1e-5)

    print("KERNEL_OK")
</pallas_src>

<mosaic_0001>
module attributes {stable_mosaic.version = 11 : i64} {
  func.func @_argmax_kernel(%arg0: i32, %arg1: memref<8x8xf32, #tpu.memory_space<vmem>>, %arg2: memref<2x128x8xf32, #tpu.memory_space<vmem>>, %arg3: memref<2x1x8xi32, #tpu.memory_space<vmem>>) attributes {dimension_semantics = [#tpu.dimension_semantics<parallel>], iteration_bounds = array<i64: 1>, scalar_prefetch = 0 : i64, scratch_operands = 0 : i64, tpu.core_type = #tpu.core_type<tc>, window_params = [{pipeline_mode = #tpu.pipeline_mode<synchronous>, transform_indices = @transform_0, window_bounds = array<i64: 8, 8>}, {transform_indices = @transform_1, window_bounds = array<i64: 2, 128, 8>}, {transform_indices = @transform_2, window_bounds = array<i64: 2, 1, 8>}]} {
    %c0 = arith.constant 0 : index
    %c0_0 = arith.constant 0 : index
    %0 = vector.load %arg1[%c0, %c0_0] : memref<8x8xf32, #tpu.memory_space<vmem>>, vector<8x8xf32>
    %c0_1 = arith.constant 0 : index
    %c0_2 = arith.constant 0 : index
    %c0_3 = arith.constant 0 : index
    %1 = vector.load %arg2[%c0_1, %c0_2, %c0_3] : memref<2x128x8xf32, #tpu.memory_space<vmem>>, vector<2x128x8xf32>
    %2 = vector.shape_cast %1 : vector<2x128x8xf32> to vector<256x8xf32>
    %cst = arith.constant dense<0.000000e+00> : vector<256x8xf32>
    %3 = tpu.matmul %2, %0, %cst {dimension_numbers = #tpu.dot_dimension_numbers<[1], [1], [0], [0], [0, 0, 1, 0], [], []>, precision = #tpu.contract_precision<fp32>} : vector<256x8xf32>, vector<8x8xf32>, vector<256x8xf32> -> vector<256x8xf32>
    %4 = vector.shape_cast %3 : vector<256x8xf32> to vector<2x128x8xf32>
    %cst_4 = arith.constant dense<0xFF800000> : vector<2x8xf32>
    %5 = vector.multi_reduction <maximumf>, %4, %cst_4 [1] : vector<2x128x8xf32> to vector<2x8xf32>
    %6 = vector.shape_cast %5 : vector<2x8xf32> to vector<2x1x8xf32>
    %7 = tpu.iota {dimensions = array<i32: 1>} : vector<2x128x8xi32>
    %8 = vector.broadcast %6 : vector<2x1x8xf32> to vector<2x128x8xf32>
    %9 = arith.cmpf oeq, %4, %8 : vector<2x128x8xf32>
    %c128_i32 = arith.constant 128 : i32
    %10 = vector.broadcast %c128_i32 : i32 to vector<2x128x8xi32>
    %11 = arith.select %9, %7, %10 : vector<2x128x8xi1>, vector<2x128x8xi32>
    %cst_5 = arith.constant dense<2147483647> : vector<2x8xi32>
    %12 = vector.multi_reduction <minsi>, %11, %cst_5 [1] : vector<2x128x8xi32> to vector<2x8xi32>
    %13 = vector.shape_cast %12 : vector<2x8xi32> to vector<2x1x8xi32>
    %c0_6 = arith.constant 0 : index
    %c0_7 = arith.constant 0 : index
    %c0_8 = arith.constant 0 : index
    %14 = vector.load %arg3[%c0_6, %c0_7, %c0_8] : memref<2x1x8xi32, #tpu.memory_space<vmem>>, vector<2x1x8xi32>
    tpu.vector_store %arg3[%c0_6, %c0_7, %c0_8], %13 {strides = array<i32>} : memref<2x1x8xi32, #tpu.memory_space<vmem>>, vector<2x1x8xi32>,
    return
  }
  func.func @transform_0(%arg0: i32) -> (i32, i32) {
    %c0_i32 = arith.constant 0 : i32
    %c0_i32_0 = arith.constant 0 : i32
    %c0_i32_1 = arith.constant 0 : i32
    return %c0_i32, %c0_i32_0 : i32, i32
  }
  func.func @transform_1(%arg0: i32) -> (i32, i32, i32) {
    %c0_i32 = arith.constant 0 : i32
    %c0_i32_0 = arith.constant 0 : i32
    %c0_i32_1 = arith.constant 0 : i32
    return %arg0, %c0_i32, %c0_i32_0 : i32, i32, i32
  }
  func.func @transform_2(%arg0: i32) -> (i32, i32, i32) {
    %c0_i32 = arith.constant 0 : i32
    %c0_i32_0 = arith.constant 0 : i32
    %c0_i32_1 = arith.constant 0 : i32
    return %arg0, %c0_i32, %c0_i32_0 : i32, i32, i32
  }
}

</mosaic_0001>

<llo_original>
// kernel: tpu_custom_call.1
$region0: #{tpu_custom_call.1}
  #allocation0 [shape = 'u32[]', space=smem, size = 0x4, offset = 0x4, fixed_abs, tag = 'smem constant byte address 0x4 - core index']
  #allocation1 [shape = 'u32[72,128]{1,0:T(1,128)}', space=vmem, size = 0x9000, scoped, tag = 'internal scratch']
  %s0 = inlined_call_operand.vmem [shape: f32[8,8], index: 0, kind: input, shape index: {}]
  %s1 = inlined_call_operand.vmem [shape: f32[2,128,8], index: 1, kind: input, shape index: {}]
  %s2 = inlined_call_operand.hbm [shape: s32[2,1,8], index: 2, kind: output, shape index: {}]
  %s3 = sld [smem:[#allocation0]]
  $region18: #{tpu_custom_call.1} parent=0
    _
  %s5 = ssub.s32 1, %s3
  %s6 = scalar_select 0, %s5, %s3
  $region1: #{tpu_custom_call.1} parent=0
    #allocation2 [shape = 'u8[1024]{0}', space=vmem, size = 0x400, scoped, tag = 'output window, operand 0, single buffered']
    #allocation3 [shape = 's32[1]{0}', space=sflag, size = 0x4, scoped, tag = 'scoped memory for tpu_custom_call.1']
    %7 = vsyncpa [#allocation3], 0
    // Predicated region
    $region2: #{tpu_custom_call.1} parent=1 // pred_check
      _
    $region3: #{tpu_custom_call.1} parent=1 // pred_check_branch
      %9 = sbr.rel (0) target = $region5
    $region4: #{tpu_custom_call.1} parent=1 // pred_region
      _
    $region5: #{tpu_custom_call.1} parent=1 // pred_fallthru
      _
    // Predicated region
    $region6: #{tpu_custom_call.1} parent=1 // pred_check
      _
    $region7: #{tpu_custom_call.1} parent=1 // pred_check_branch
      %11 = sbr.rel (0) target = $region9
    $region8: #{tpu_custom_call.1} parent=1 // pred_region
      _
    $region9: #{tpu_custom_call.1} parent=1 // pred_fallthru
      _
    %v12 = vld [vmem:[%s0] sm:$0xff]
    %v13 = vld [vmem:[%s1] sm:$0xff]
    %v14 = vld [vmem:[%s1 + $0x8] sm:$0xff]
    %v15 = vld [vmem:[%s1 + $0x10] sm:$0xff]
    %v16 = vld [vmem:[%s1 + $0x18] sm:$0xff]
    %v17 = vld [vmem:[%s1 + $0x20] sm:$0xff]
    %v18 = vld [vmem:[%s1 + $0x28] sm:$0xff]
    %v19 = vld [vmem:[%s1 + $0x30] sm:$0xff]
    %v20 = vld [vmem:[%s1 + $0x38] sm:$0xff]
    %v21 = vld [vmem:[%s1 + $0x40] sm:$0xff]
    %v22 = vld [vmem:[%s1 + $0x48] sm:$0xff]
    %v23 = vld [vmem:[%s1 + $0x50] sm:$0xff]
    %v24 = vld [vmem:[%s1 + $0x58] sm:$0xff]
    %v25 = vld [vmem:[%s1 + $0x60] sm:$0xff]
    %v26 = vld [vmem:[%s1 + $0x68] sm:$0xff]
    %v27 = vld [vmem:[%s1 + $0x70] sm:$0xff]
    %v28 = vld [vmem:[%s1 + $0x78] sm:$0xff]
    %v29 = vld [vmem:[%s1 + $0x80] sm:$0xff]
    %v30 = vld [vmem:[%s1 + $0x88] sm:$0xff]
    %v31 = vld [vmem:[%s1 + $0x90] sm:$0xff]
    %v32 = vld [vmem:[%s1 + $0x98] sm:$0xff]
    %v33 = vld [vmem:[%s1 + $0xa0] sm:$0xff]
    %v34 = vld [vmem:[%s1 + $0xa8] sm:$0xff]
    %v35 = vld [vmem:[%s1 + $0xb0] sm:$0xff]
    %v36 = vld [vmem:[%s1 + $0xb8] sm:$0xff]
    %v37 = vld [vmem:[%s1 + $0xc0] sm:$0xff]
    %v38 = vld [vmem:[%s1 + $0xc8] sm:$0xff]
    %v39 = vld [vmem:[%s1 + $0xd0] sm:$0xff]
    %v40 = vld [vmem:[%s1 + $0xd8] sm:$0xff]
    %v41 = vld [vmem:[%s1 + $0xe0] sm:$0xff]
    %v42 = vld [vmem:[%s1 + $0xe8] sm:$0xff]
    %v43 = vld [vmem:[%s1 + $0xf0] sm:$0xff]
    %v44 = vld [vmem:[%s1 + $0xf8] sm:$0xff]
    %vm45 = vcmask 64512
    %v47 = vsel %vm45, %v13, 0
    %v50 = vsel %vm45, %v14, 0
    %v53 = vsel %vm45, %v15, 0
    %v56 = vsel %vm45, %v16, 0
    %v59 = vsel %vm45, %v17, 0
    %v62 = vsel %vm45, %v18, 0
    %v65 = vsel %vm45, %v19, 0
    %v68 = vsel %vm45, %v20, 0
    %v71 = vsel %vm45, %v21, 0
    %v74 = vsel %vm45, %v22, 0
    %v77 = vsel %vm45, %v23, 0
    %v80 = vsel %vm45, %v24, 0
    %v83 = vsel %vm45, %v25, 0
    %v86 = vsel %vm45, %v26, 0
    %v89 = vsel %vm45, %v27, 0
    %v92 = vsel %vm45, %v28, 0
    %v95 = vsel %vm45, %v29, 0
    %v98 = vsel %vm45, %v30, 0
    %v101 = vsel %vm45, %v31, 0
    %v104 = vsel %vm45, %v32, 0
    %v107 = vsel %vm45, %v33, 0
    %v110 = vsel %vm45, %v34, 0
    %v113 = vsel %vm45, %v35, 0
    %v116 = vsel %vm45, %v36, 0
    %v119 = vsel %vm45, %v37, 0
    %v122 = vsel %vm45, %v38, 0
    %v125 = vsel %vm45, %v39, 0
    %v128 = vsel %vm45, %v40, 0
    %v131 = vsel %vm45, %v41, 0
    %v134 = vsel %vm45, %v42, 0
    %v137 = vsel %vm45, %v43, 0
    %v140 = vsel %vm45, %v44, 0
    %v143 = vsel %vm45, %v12, 0
    %145 = vmatpush.xpose.msra.mxu0 0.0
    %146 = vmatpush.xpose.msra.mxu0 0.0
    %147 = vmatpush.xpose.msra.mxu0 0.0
    %148 = vmatpush.xpose.msra.mxu0 0.0
    %149 = vmatpush.xpose.msra.mxu0 0.0
    %150 = vmatpush.xpose.msra.mxu0 0.0
    %151 = vmatpush.xpose.msra.mxu0 0.0
    %152 = vmatpush.xpose.msra.mxu0 0.0
    %153 = vmatpush.xpose.msra.mxu0 0.0
    %154 = vmatpush.xpose.msra.mxu0 0.0
    %155 = vmatpush.xpose.msra.mxu0 0.0
    %156 = vmatpush.xpose.msra.mxu0 0.0
    %157 = vmatpush.xpose.msra.mxu0 0.0
    %158 = vmatpush.xpose.msra.mxu0 0.0
    %159 = vmatpush.xpose.msra.mxu0 0.0
    %v160 = vand.u32 %v143, 4294901760
    %161 = vmatpush.xpose.msra.mxu0 %v160
    %v162 = vand.u32 %v47, 4294901760
    %v163 = vsub.f32 %v47, %v162
    %v164 = vand.u32 %v163, 4294901760
    %v165 = vsub.f32 %v163, %v164
    %v166 = vand.u32 %v165, 4294901760
    %167 = vmatmul.f32.gmra.mxu0 %v166
    %v168 = vpop.f32.mrf.mxu0
    %v169 = vadd.f32 0.0, %v168
    %v170 = vand.u32 %v50, 4294901760
    %v171 = vsub.f32 %v50, %v170
    %v172 = vand.u32 %v171, 4294901760
    %v173 = vsub.f32 %v171, %v172
    %v174 = vand.u32 %v173, 4294901760
    %175 = vmatmul.f32.gmra.mxu0 %v174
    %v176 = vpop.f32.mrf.mxu0
    %v177 = vadd.f32 0.0, %v176
    %v178 = vand.u32 %v53, 4294901760
    %v179 = vsub.f32 %v53, %v178
    %v180 = vand.u32 %v179, 4294901760
    %v181 = vsub.f32 %v179, %v180
    %v182 = vand.u32 %v181, 4294901760
    %183 = vmatmul.f32.gmra.mxu0 %v182
    %v184 = vpop.f32.mrf.mxu0
    %v185 = vadd.f32 0.0, %v184
    %v186 = vand.u32 %v56, 4294901760
    %v187 = vsub.f32 %v56, %v186
    %v188 = vand.u32 %v187, 4294901760
    %v189 = vsub.f32 %v187, %v188
    %v190 = vand.u32 %v189, 4294901760
    %191 = vmatmul.f32.gmra.mxu0 %v190
    %v192 = vpop.f32.mrf.mxu0
    %v193 = vadd.f32 0.0, %v192
    %v194 = vand.u32 %v59, 4294901760
    %v195 = vsub.f32 %v59, %v194
    %v196 = vand.u32 %v195, 4294901760
    %v197 = vsub.f32 %v195, %v196
    %v198 = vand.u32 %v197, 4294901760
    %199 = vmatmul.f32.gmra.mxu0 %v198
    %v200 = vpop.f32.mrf.mxu0
    %v201 = vadd.f32 0.0, %v200
    %v202 = vand.u32 %v62, 4294901760
    %v203 = vsub.f32 %v62, %v202
    %v204 = vand.u32 %v203, 4294901760
    %v205 = vsub.f32 %v203, %v204
    %v206 = vand.u32 %v205, 4294901760
    %207 = vmatmul.f32.gmra.mxu0 %v206
    %v208 = vpop.f32.mrf.mxu0
    %v209 = vadd.f32 0.0, %v208
    %v210 = vand.u32 %v65, 4294901760
    %v211 = vsub.f32 %v65, %v210
    %v212 = vand.u32 %v211, 4294901760
    %v213 = vsub.f32 %v211, %v212
    %v214 = vand.u32 %v213, 4294901760
    %215 = vmatmul.f32.gmra.mxu0 %v214
    %v216 = vpop.f32.mrf.mxu0
    %v217 = vadd.f32 0.0, %v216
    %v218 = vand.u32 %v68, 4294901760
    %v219 = vsub.f32 %v68, %v218
    %v220 = vand.u32 %v219, 4294901760
    %v221 = vsub.f32 %v219, %v220
    %v222 = vand.u32 %v221, 4294901760
    %223 = vmatmul.f32.gmra.mxu0 %v222
    %v224 = vpop.f32.mrf.mxu0
    %v225 = vadd.f32 0.0, %v224
    %v226 = vand.u32 %v71, 4294901760
    %v227 = vsub.f32 %v71, %v226
    %v228 = vand.u32 %v227, 4294901760
    %v229 = vsub.f32 %v227, %v228
    %v230 = vand.u32 %v229, 4294901760
    %231 = vmatmul.f32.gmra.mxu0 %v230
    %v232 = vpop.f32.mrf.mxu0
    %v233 = vadd.f32 0.0, %v232
    %v234 = vand.u32 %v74, 4294901760
    %v235 = vsub.f32 %v74, %v234
    %v236 = vand.u32 %v235, 4294901760
    %v237 = vsub.f32 %v235, %v236
    %v238 = vand.u32 %v237, 4294901760
    %239 = vmatmul.f32.gmra.mxu0 %v238
    %v240 = vpop.f32.mrf.mxu0
    %v241 = vadd.f32 0.0, %v240
    %v242 = vand.u32 %v77, 4294901760
    %v243 = vsub.f32 %v77, %v242
    %v244 = vand.u32 %v243, 4294901760
    %v245 = vsub.f32 %v243, %v244
    %v246 = vand.u32 %v245, 4294901760
    %247 = vmatmul.f32.gmra.mxu0 %v246
    %v248 = vpop.f32.mrf.mxu0
    %v249 = vadd.f32 0.0, %v248
    %v250 = vand.u32 %v80, 4294901760
    %v251 = vsub.f32 %v80, %v250
    %v252 = vand.u32 %v251, 4294901760
    %v253 = vsub.f32 %v251, %v252
    %v254 = vand.u32 %v253, 4294901760
    %255 = vmatmul.f32.gmra.mxu0 %v254
    %v256 = vpop.f32.mrf.mxu0
    %v257 = vadd.f32 0.0, %v256
    %v258 = vand.u32 %v83, 4294901760
    %v259 = vsub.f32 %v83, %v258
    %v260 = vand.u32 %v259, 4294901760
    %v261 = vsub.f32 %v259, %v260
    %v262 = vand.u32 %v261, 4294901760
    %263 = vmatmul.f32.gmra.mxu0 %v262
    %v264 = vpop.f32.mrf.mxu0
    %v265 = vadd.f32 0.0, %v264
    %v266 = vand.u32 %v86, 4294901760
    %v267 = vsub.f32 %v86, %v266
    %v268 = vand.u32 %v267, 4294901760
    %v269 = vsub.f32 %v267, %v268
    %v270 = vand.u32 %v269, 4294901760
    %271 = vmatmul.f32.gmra.mxu0 %v270
    %v272 = vpop.f32.mrf.mxu0
    %v273 = vadd.f32 0.0, %v272
    %v274 = vand.u32 %v89, 4294901760
    %v275 = vsub.f32 %v89, %v274
    %v276 = vand.u32 %v275, 4294901760
    %v277 = vsub.f32 %v275, %v276
    %v278 = vand.u32 %v277, 4294901760
    %279 = vmatmul.f32.gmra.mxu0 %v278
    %v280 = vpop.f32.mrf.mxu0
    %v281 = vadd.f32 0.0, %v280
    %v282 = vand.u32 %v92, 4294901760
    %v283 = vsub.f32 %v92, %v282
    %v284 = vand.u32 %v283, 4294901760
    %v285 = vsub.f32 %v283, %v284
    %v286 = vand.u32 %v285, 4294901760
    %287 = vmatmul.f32.gmra.mxu0 %v286
    %v288 = vpop.f32.mrf.mxu0
    %v289 = vadd.f32 0.0, %v288
    %v290 = vand.u32 %v95, 4294901760
    %v291 = vsub.f32 %v95, %v290
    %v292 = vand.u32 %v291, 4294901760
    %v293 = vsub.f32 %v291, %v292
    %v294 = vand.u32 %v293, 4294901760
    %295 = vmatmul.f32.gmra.mxu0 %v294
    %v296 = vpop.f32.mrf.mxu0
    %v297 = vadd.f32 0.0, %v296
    %v298 = vand.u32 %v98, 4294901760
    %v299 = vsub.f32 %v98, %v298
    %v300 = vand.u32 %v299, 4294901760
    %v301 = vsub.f32 %v299, %v300
    %v302 = vand.u32 %v301, 4294901760
    %303 = vmatmul.f32.gmra.mxu0 %v302
    %v304 = vpop.f32.mrf.mxu0
    %v305 = vadd.f32 0.0, %v304
    %v306 = vand.u32 %v101, 4294901760
    %v307 = vsub.f32 %v101, %v306
    %v308 = vand.u32 %v307, 4294901760
    %v309 = vsub.f32 %v307, %v308
    %v310 = vand.u32 %v309, 4294901760
    %311 = vmatmul.f32.gmra.mxu0 %v310
    %v312 = vpop.f32.mrf.mxu0
    %v313 = vadd.f32 0.0, %v312
    %v314 = vand.u32 %v104, 4294901760
    %v315 = vsub.f32 %v104, %v314
    %v316 = vand.u32 %v315, 4294901760
    %v317 = vsub.f32 %v315, %v316
    %v318 = vand.u32 %v317, 4294901760
    %319 = vmatmul.f32.gmra.mxu0 %v318
    %v320 = vpop.f32.mrf.mxu0
    %v321 = vadd.f32 0.0, %v320
    %v322 = vand.u32 %v107, 4294901760
    %v323 = vsub.f32 %v107, %v322
    %v324 = vand.u32 %v323, 4294901760
    %v325 = vsub.f32 %v323, %v324
    %v326 = vand.u32 %v325, 4294901760
    %327 = vmatmul.f32.gmra.mxu0 %v326
    %v328 = vpop.f32.mrf.mxu0
    %v329 = vadd.f32 0.0, %v328
    %v330 = vand.u32 %v110, 4294901760
    %v331 = vsub.f32 %v110, %v330
    %v332 = vand.u32 %v331, 4294901760
    %v333 = vsub.f32 %v331, %v332
    %v334 = vand.u32 %v333, 4294901760
    %335 = vmatmul.f32.gmra.mxu0 %v334
    %v336 = vpop.f32.mrf.mxu0
    %v337 = vadd.f32 0.0, %v336
    %v338 = vand.u32 %v113, 4294901760
    %v339 = vsub.f32 %v113, %v338
    %v340 = vand.u32 %v339, 4294901760
    %v341 = vsub.f32 %v339, %v340
    %v342 = vand.u32 %v341, 4294901760
    %343 = vmatmul.f32.gmra.mxu0 %v342
    %v344 = vpop.f32.mrf.mxu0
    %v345 = vadd.f32 0.0, %v344
    %v346 = vand.u32 %v116, 4294901760
    %v347 = vsub.f32 %v116, %v346
    %v348 = vand.u32 %v347, 4294901760
    %v349 = vsub.f32 %v347, %v348
    %v350 = vand.u32 %v349, 4294901760
    %351 = vmatmul.f32.gmra.mxu0 %v350
    %v352 = vpop.f32.mrf.mxu0
    %v353 = vadd.f32 0.0, %v352
    %v354 = vand.u32 %v119, 4294901760
    %v355 = vsub.f32 %v119, %v354
    %v356 = vand.u32 %v355, 4294901760
    %v357 = vsub.f32 %v355, %v356
    %v358 = vand.u32 %v357, 4294901760
    %359 = vmatmul.f32.gmra.mxu0 %v358
    %v360 = vpop.f32.mrf.mxu0
    %v361 = vadd.f32 0.0, %v360
    %v362 = vand.u32 %v122, 4294901760
    %v363 = vsub.f32 %v122, %v362
    %v364 = vand.u32 %v363, 4294901760
    %v365 = vsub.f32 %v363, %v364
    %v366 = vand.u32 %v365, 4294901760
    %367 = vmatmul.f32.gmra.mxu0 %v366
    %v368 = vpop.f32.mrf.mxu0
    %v369 = vadd.f32 0.0, %v368
    %v370 = vand.u32 %v125, 4294901760
    %v371 = vsub.f32 %v125, %v370
    %v372 = vand.u32 %v371, 4294901760
    %v373 = vsub.f32 %v371, %v372
    %v374 = vand.u32 %v373, 4294901760
    %375 = vmatmul.f32.gmra.mxu0 %v374
    %v376 = vpop.f32.mrf.mxu0
    %v377 = vadd.f32 0.0, %v376
    %v378 = vand.u32 %v128, 4294901760
    %v379 = vsub.f32 %v128, %v378
    %v380 = vand.u32 %v379, 4294901760
    %v381 = vsub.f32 %v379, %v380
    %v382 = vand.u32 %v381, 4294901760
    %383 = vmatmul.f32.gmra.mxu0 %v382
    %v384 = vpop.f32.mrf.mxu0
    %v385 = vadd.f32 0.0, %v384
    %v386 = vand.u32 %v131, 4294901760
    %v387 = vsub.f32 %v131, %v386
    %v388 = vand.u32 %v387, 4294901760
    %v389 = vsub.f32 %v387, %v388
    %v390 = vand.u32 %v389, 4294901760
    %391 = vmatmul.f32.gmra.mxu0 %v390
    %v392 = vpop.f32.mrf.mxu0
    %v393 = vadd.f32 0.0, %v392
    %v394 = vand.u32 %v134, 4294901760
    %v395 = vsub.f32 %v134, %v394
    %v396 = vand.u32 %v395, 4294901760
    %v397 = vsub.f32 %v395, %v396
    %v398 = vand.u32 %v397, 4294901760
    %399 = vmatmul.f32.gmra.mxu0 %v398
    %v400 = vpop.f32.mrf.mxu0
    %v401 = vadd.f32 0.0, %v400
    %v402 = vand.u32 %v137, 4294901760
    %v403 = vsub.f32 %v137, %v402
    %v404 = vand.u32 %v403, 4294901760
    %v405 = vsub.f32 %v403, %v404
    %v406 = vand.u32 %v405, 4294901760
    %407 = vmatmul.f32.gmra.mxu0 %v406
    %v408 = vpop.f32.mrf.mxu0
    %v409 = vadd.f32 0.0, %v408
    %v410 = vand.u32 %v140, 4294901760
    %v411 = vsub.f32 %v140, %v410
    %v412 = vand.u32 %v411, 4294901760
    %v413 = vsub.f32 %v411, %v412
    %v414 = vand.u32 %v413, 4294901760
    %415 = vmatmul.f32.gmra.mxu0 %v414
    %v416 = vpop.f32.mrf.mxu0
    %v417 = vadd.f32 0.0, %v416
    %418 = vdwg.mxu0
    %419 = vmatpush.xpose.msra.mxu0 0.0
    %420 = vmatpush.xpose.msra.mxu0 0.0
    %421 = vmatpush.xpose.msra.mxu0 0.0
    %422 = vmatpush.xpose.msra.mxu0 0.0
    %423 = vmatpush.xpose.msra.mxu0 0.0
    %424 = vmatpush.xpose.msra.mxu0 0.0
    %425 = vmatpush.xpose.msra.mxu0 0.0
    %426 = vmatpush.xpose.msra.mxu0 0.0
    %427 = vmatpush.xpose.msra.mxu0 0.0
    %428 = vmatpush.xpose.msra.mxu0 0.0
    %429 = vmatpush.xpose.msra.mxu0 0.0
    %430 = vmatpush.xpose.msra.mxu0 0.0
    %431 = vmatpush.xpose.msra.mxu0 0.0
    %432 = vmatpush.xpose.msra.mxu0 0.0
    %433 = vmatpush.xpose.msra.mxu0 0.0
    %v434 = vand.u32 %v143, 4294901760
    %v435 = vsub.f32 %v143, %v434
    %v436 = vand.u32 %v435, 4294901760
    %v437 = vsub.f32 %v435, %v436
    %v438 = vand.u32 %v437, 4294901760
    %439 = vmatpush.xpose.msra.mxu0 %v438
    %v440 = vand.u32 %v47, 4294901760
    %441 = vmatmul.f32.gmra.mxu0 %v440
    %v442 = vpop.f32.mrf.mxu0
    %v443 = vadd.f32 %v169, %v442
    %v444 = vand.u32 %v50, 4294901760
    %445 = vmatmul.f32.gmra.mxu0 %v444
    %v446 = vpop.f32.mrf.mxu0
    %v447 = vadd.f32 %v177, %v446
    %v448 = vand.u32 %v53, 4294901760
    %449 = vmatmul.f32.gmra.mxu0 %v448
    %v450 = vpop.f32.mrf.mxu0
    %v451 = vadd.f32 %v185, %v450
    %v452 = vand.u32 %v56, 4294901760
    %453 = vmatmul.f32.gmra.mxu0 %v452
    %v454 = vpop.f32.mrf.mxu0
    %v455 = vadd.f32 %v193, %v454
    %v456 = vand.u32 %v59, 4294901760
    %457 = vmatmul.f32.gmra.mxu0 %v456
    %v458 = vpop.f32.mrf.mxu0
    %v459 = vadd.f32 %v201, %v458
    %v460 = vand.u32 %v62, 4294901760
    %461 = vmatmul.f32.gmra.mxu0 %v460
    %v462 = vpop.f32.mrf.mxu0
    %v463 = vadd.f32 %v209, %v462
    %v464 = vand.u32 %v65, 4294901760
    %465 = vmatmul.f32.gmra.mxu0 %v464
    %v466 = vpop.f32.mrf.mxu0
    %v467 = vadd.f32 %v217, %v466
    %v468 = vand.u32 %v68, 4294901760
    %469 = vmatmul.f32.gmra.mxu0 %v468
    %v470 = vpop.f32.mrf.mxu0
    %v471 = vadd.f32 %v225, %v470
    %v472 = vand.u32 %v71, 4294901760
    %473 = vmatmul.f32.gmra.mxu0 %v472
    %v474 = vpop.f32.mrf.mxu0
    %v475 = vadd.f32 %v233, %v474
    %v476 = vand.u32 %v74, 4294901760
    %477 = vmatmul.f32.gmra.mxu0 %v476
    %v478 = vpop.f32.mrf.mxu0
    %v479 = vadd.f32 %v241, %v478
    %v480 = vand.u32 %v77, 4294901760
    %481 = vmatmul.f32.gmra.mxu0 %v480
    %v482 = vpop.f32.mrf.mxu0
    %v483 = vadd.f32 %v249, %v482
    %v484 = vand.u32 %v80, 4294901760
    %485 = vmatmul.f32.gmra.mxu0 %v484
    %v486 = vpop.f32.mrf.mxu0
    %v487 = vadd.f32 %v257, %v486
    %v488 = vand.u32 %v83, 4294901760
    %489 = vmatmul.f32.gmra.mxu0 %v488
    %v490 = vpop.f32.mrf.mxu0
    %v491 = vadd.f32 %v265, %v490
    %v492 = vand.u32 %v86, 4294901760
    %493 = vmatmul.f32.gmra.mxu0 %v492
    %v494 = vpop.f32.mrf.mxu0
    %v495 = vadd.f32 %v273, %v494
    %v496 = vand.u32 %v89, 4294901760
    %497 = vmatmul.f32.gmra.mxu0 %v496
    %v498 = vpop.f32.mrf.mxu0
    %v499 = vadd.f32 %v281, %v498
    %v500 = vand.u32 %v92, 4294901760
    %501 = vmatmul.f32.gmra.mxu0 %v500
    %v502 = vpop.f32.mrf.mxu0
    %v503 = vadd.f32 %v289, %v502
    %v504 = vand.u32 %v95, 4294901760
    %505 = vmatmul.f32.gmra.mxu0 %v504
    %v506 = vpop.f32.mrf.mxu0
    %v507 = vadd.f32 %v297, %v506
    %v508 = vand.u32 %v98, 4294901760
    %509 = vmatmul.f32.gmra.mxu0 %v508
    %v510 = vpop.f32.mrf.mxu0
    %v511 = vadd.f32 %v305, %v510
    %v512 = vand.u32 %v101, 4294901760
    %513 = vmatmul.f32.gmra.mxu0 %v512
    %v514 = vpop.f32.mrf.mxu0
    %v515 = vadd.f32 %v313, %v514
    %v516 = vand.u32 %v104, 4294901760
    %517 = vmatmul.f32.gmra.mxu0 %v516
    %v518 = vpop.f32.mrf.mxu0
    %v519 = vadd.f32 %v321, %v518
    %v520 = vand.u32 %v107, 4294901760
    %521 = vmatmul.f32.gmra.mxu0 %v520
    %v522 = vpop.f32.mrf.mxu0
    %v523 = vadd.f32 %v329, %v522
    %v524 = vand.u32 %v110, 4294901760
    %525 = vmatmul.f32.gmra.mxu0 %v524
    %v526 = vpop.f32.mrf.mxu0
    %v527 = vadd.f32 %v337, %v526
    %v528 = vand.u32 %v113, 4294901760
    %529 = vmatmul.f32.gmra.mxu0 %v528
    %v530 = vpop.f32.mrf.mxu0
    %v531 = vadd.f32 %v345, %v530
    %v532 = vand.u32 %v116, 4294901760
    %533 = vmatmul.f32.gmra.mxu0 %v532
    %v534 = vpop.f32.mrf.mxu0
    %v535 = vadd.f32 %v353, %v534
    %v536 = vand.u32 %v119, 4294901760
    %537 = vmatmul.f32.gmra.mxu0 %v536
    %v538 = vpop.f32.mrf.mxu0
    %v539 = vadd.f32 %v361, %v538
    %v540 = vand.u32 %v122, 4294901760
    %541 = vmatmul.f32.gmra.mxu0 %v540
    %v542 = vpop.f32.mrf.mxu0
    %v543 = vadd.f32 %v369, %v542
    %v544 = vand.u32 %v125, 4294901760
    %545 = vmatmul.f32.gmra.mxu0 %v544
    %v546 = vpop.f32.mrf.mxu0
    %v547 = vadd.f32 %v377, %v546
    %v548 = vand.u32 %v128, 4294901760
    %549 = vmatmul.f32.gmra.mxu0 %v548
    %v550 = vpop.f32.mrf.mxu0
    %v551 = vadd.f32 %v385, %v550
    %v552 = vand.u32 %v131, 4294901760
    %553 = vmatmul.f32.gmra.mxu0 %v552
    %v554 = vpop.f32.mrf.mxu0
    %v555 = vadd.f32 %v393, %v554
    %v556 = vand.u32 %v134, 4294901760
    %557 = vmatmul.f32.gmra.mxu0 %v556
    %v558 = vpop.f32.mrf.mxu0
    %v559 = vadd.f32 %v401, %v558
    %v560 = vand.u32 %v137, 4294901760
    %561 = vmatmul.f32.gmra.mxu0 %v560
    %v562 = vpop.f32.mrf.mxu0
    %v563 = vadd.f32 %v409, %v562
    %v564 = vand.u32 %v140, 4294901760
    %565 = vmatmul.f32.gmra.mxu0 %v564
    %v566 = vpop.f32.mrf.mxu0
    %v567 = vadd.f32 %v417, %v566
    %568 = vdwg.mxu0
    %569 = vmatpush.xpose.msra.mxu0 0.0
    %570 = vmatpush.xpose.msra.mxu0 0.0
    %571 = vmatpush.xpose.msra.mxu0 0.0
    %572 = vmatpush.xpose.msra.mxu0 0.0
    %573 = vmatpush.xpose.msra.mxu0 0.0
    %574 = vmatpush.xpose.msra.mxu0 0.0
    %575 = vmatpush.xpose.msra.mxu0 0.0
    %576 = vmatpush.xpose.msra.mxu0 0.0
    %577 = vmatpush.xpose.msra.mxu0 0.0
    %578 = vmatpush.xpose.msra.mxu0 0.0
    %579 = vmatpush.xpose.msra.mxu0 0.0
    %580 = vmatpush.xpose.msra.mxu0 0.0
    %581 = vmatpush.xpose.msra.mxu0 0.0
    %582 = vmatpush.xpose.msra.mxu0 0.0
    %583 = vmatpush.xpose.msra.mxu0 0.0
    %v584 = vand.u32 %v143, 4294901760
    %v585 = vsub.f32 %v143, %v584
    %586 = vmatpush.xpose.msra.mxu0 %v585
    %v587 = vand.u32 %v47, 4294901760
    %v588 = vsub.f32 %v47, %v587
    %589 = vmatmul.f32.gmra.mxu0 %v588
    %v590 = vpop.f32.mrf.mxu0
    %v591 = vadd.f32 %v443, %v590
    %v592 = vand.u32 %v50, 4294901760
    %v593 = vsub.f32 %v50, %v592
    %594 = vmatmul.f32.gmra.mxu0 %v593
    %v595 = vpop.f32.mrf.mxu0
    %v596 = vadd.f32 %v447, %v595
    %v597 = vand.u32 %v53, 4294901760
    %v598 = vsub.f32 %v53, %v597
    %599 = vmatmul.f32.gmra.mxu0 %v598
    %v600 = vpop.f32.mrf.mxu0
    %v601 = vadd.f32 %v451, %v600
    %v602 = vand.u32 %v56, 4294901760
    %v603 = vsub.f32 %v56, %v602
    %604 = vmatmul.f32.gmra.mxu0 %v603
    %v605 = vpop.f32.mrf.mxu0
    %v606 = vadd.f32 %v455, %v605
    %v607 = vand.u32 %v59, 4294901760
    %v608 = vsub.f32 %v59, %v607
    %609 = vmatmul.f32.gmra.mxu0 %v608
    %v610 = vpop.f32.mrf.mxu0
    %v611 = vadd.f32 %v459, %v610
    %v612 = vand.u32 %v62, 4294901760
    %v613 = vsub.f32 %v62, %v612
    %614 = vmatmul.f32.gmra.mxu0 %v613
    %v615 = vpop.f32.mrf.mxu0
    %v616 = vadd.f32 %v463, %v615
    %v617 = vand.u32 %v65, 4294901760
    %v618 = vsub.f32 %v65, %v617
    %619 = vmatmul.f32.gmra.mxu0 %v618
    %v620 = vpop.f32.mrf.mxu0
    %v621 = vadd.f32 %v467, %v620
    %v622 = vand.u32 %v68, 4294901760
    %v623 = vsub.f32 %v68, %v622
    %624 = vmatmul.f32.gmra.mxu0 %v623
    %v625 = vpop.f32.mrf.mxu0
    %v626 = vadd.f32 %v471, %v625
    %v627 = vand.u32 %v71, 4294901760
    %v628 = vsub.f32 %v71, %v627
    %629 = vmatmul.f32.gmra.mxu0 %v628
    %v630 = vpop.f32.mrf.mxu0
    %v631 = vadd.f32 %v475, %v630
    %v632 = vand.u32 %v74, 4294901760
    %v633 = vsub.f32 %v74, %v632
    %634 = vmatmul.f32.gmra.mxu0 %v633
    %v635 = vpop.f32.mrf.mxu0
    %v636 = vadd.f32 %v479, %v635
    %v637 = vand.u32 %v77, 4294901760
    %v638 = vsub.f32 %v77, %v637
    %639 = vmatmul.f32.gmra.mxu0 %v638
    %v640 = vpop.f32.mrf.mxu0
    %v641 = vadd.f32 %v483, %v640
    %v642 = vand.u32 %v80, 4294901760
    %v643 = vsub.f32 %v80, %v642
    %644 = vmatmul.f32.gmra.mxu0 %v643
    %v645 = vpop.f32.mrf.mxu0
    %v646 = vadd.f32 %v487, %v645
    %v647 = vand.u32 %v83, 4294901760
    %v648 = vsub.f32 %v83, %v647
    %649 = vmatmul.f32.gmra.mxu0 %v648
    %v650 = vpop.f32.mrf.mxu0
    %v651 = vadd.f32 %v491, %v650
    %v652 = vand.u32 %v86, 4294901760
    %v653 = vsub.f32 %v86, %v652
    %654 = vmatmul.f32.gmra.mxu0 %v653
    %v655 = vpop.f32.mrf.mxu0
    %v656 = vadd.f32 %v495, %v655
    %v657 = vand.u32 %v89, 4294901760
    %v658 = vsub.f32 %v89, %v657
    %659 = vmatmul.f32.gmra.mxu0 %v658
    %v660 = vpop.f32.mrf.mxu0
    %v661 = vadd.f32 %v499, %v660
    %v662 = vand.u32 %v92, 4294901760
    %v663 = vsub.f32 %v92, %v662
    %664 = vmatmul.f32.gmra.mxu0 %v663
    %v665 = vpop.f32.mrf.mxu0
    %v666 = vadd.f32 %v503, %v665
    %v667 = vand.u32 %v95, 4294901760
    %v668 = vsub.f32 %v95, %v667
    %669 = vmatmul.f32.gmra.mxu0 %v668
    %v670 = vpop.f32.mrf.mxu0
    %v671 = vadd.f32 %v507, %v670
    %v672 = vand.u32 %v98, 4294901760
    %v673 = vsub.f32 %v98, %v672
    %674 = vmatmul.f32.gmra.mxu0 %v673
    %v675 = vpop.f32.mrf.mxu0
    %v676 = vadd.f32 %v511, %v675
    %v677 = vand.u32 %v101, 4294901760
    %v678 = vsub.f32 %v101, %v677
    %679 = vmatmul.f32.gmra.mxu0 %v678
    %v680 = vpop.f32.mrf.mxu0
    %v681 = vadd.f32 %v515, %v680
    %v682 = vand.u32 %v104, 4294901760
    %v683 = vsub.f32 %v104, %v682
    %684 = vmatmul.f32.gmra.mxu0 %v683
    %v685 = vpop.f32.mrf.mxu0
    %v686 = vadd.f32 %v519, %v685
    %v687 = vand.u32 %v107, 4294901760
    %v688 = vsub.f32 %v107, %v687
    %689 = vmatmul.f32.gmra.mxu0 %v688
    %v690 = vpop.f32.mrf.mxu0
    %v691 = vadd.f32 %v523, %v690
    %v692 = vand.u32 %v110, 4294901760
    %v693 = vsub.f32 %v110, %v692
    %694 = vmatmul.f32.gmra.mxu0 %v693
    %v695 = vpop.f32.mrf.mxu0
    %v696 = vadd.f32 %v527, %v695
    %v697 = vand.u32 %v113, 4294901760
    %v698 = vsub.f32 %v113, %v697
    %699 = vmatmul.f32.gmra.mxu0 %v698
    %v700 = vpop.f32.mrf.mxu0
    %v701 = vadd.f32 %v531, %v700
    %v702 = vand.u32 %v116, 4294901760
    %v703 = vsub.f32 %v116, %v702
    %704 = vmatmul.f32.gmra.mxu0 %v703
    %v705 = vpop.f32.mrf.mxu0
    %v706 = vadd.f32 %v535, %v705
    %v707 = vand.u32 %v119, 4294901760
    %v708 = vsub.f32 %v119, %v707
    %709 = vmatmul.f32.gmra.mxu0 %v708
    %v710 = vpop.f32.mrf.mxu0
    %v711 = vadd.f32 %v539, %v710
    %v712 = vand.u32 %v122, 4294901760
    %v713 = vsub.f32 %v122, %v712
    %714 = vmatmul.f32.gmra.mxu0 %v713
    %v715 = vpop.f32.mrf.mxu0
    %v716 = vadd.f32 %v543, %v715
    %v717 = vand.u32 %v125, 4294901760
    %v718 = vsub.f32 %v125, %v717
    %719 = vmatmul.f32.gmra.mxu0 %v718
    %v720 = vpop.f32.mrf.mxu0
    %v721 = vadd.f32 %v547, %v720
    %v722 = vand.u32 %v128, 4294901760
    %v723 = vsub.f32 %v128, %v722
    %724 = vmatmul.f32.gmra.mxu0 %v723
    %v725 = vpop.f32.mrf.mxu0
    %v726 = vadd.f32 %v551, %v725
    %v727 = vand.u32 %v131, 4294901760
    %v728 = vsub.f32 %v131, %v727
    %729 = vmatmul.f32.gmra.mxu0 %v728
    %v730 = vpop.f32.mrf.mxu0
    %v731 = vadd.f32 %v555, %v730
    %v732 = vand.u32 %v134, 4294901760
    %v733 = vsub.f32 %v134, %v732
    %734 = vmatmul.f32.gmra.mxu0 %v733
    %v735 = vpop.f32.mrf.mxu0
    %v736 = vadd.f32 %v559, %v735
    %v737 = vand.u32 %v137, 4294901760
    %v738 = vsub.f32 %v137, %v737
    %739 = vmatmul.f32.gmra.mxu0 %v738
    %v740 = vpop.f32.mrf.mxu0
    %v741 = vadd.f32 %v563, %v740
    %v742 = vand.u32 %v140, 4294901760
    %v743 = vsub.f32 %v140, %v742
    %744 = vmatmul.f32.gmra.mxu0 %v743
    %v745 = vpop.f32.mrf.mxu0
    %v746 = vadd.f32 %v567, %v745
    %747 = vdwg.mxu0
    %748 = vmatpush.xpose.msra.mxu0 0.0
    %749 = vmatpush.xpose.msra.mxu0 0.0
    %750 = vmatpush.xpose.msra.mxu0 0.0
    %751 = vmatpush.xpose.msra.mxu0 0.0
    %752 = vmatpush.xpose.msra.mxu0 0.0
    %753 = vmatpush.xpose.msra.mxu0 0.0
    %754 = vmatpush.xpose.msra.mxu0 0.0
    %755 = vmatpush.xpose.msra.mxu0 0.0
    %756 = vmatpush.xpose.msra.mxu0 0.0
    %757 = vmatpush.xpose.msra.mxu0 0.0
    %758 = vmatpush.xpose.msra.mxu0 0.0
    %759 = vmatpush.xpose.msra.mxu0 0.0
    %760 = vmatpush.xpose.msra.mxu0 0.0
    %761 = vmatpush.xpose.msra.mxu0 0.0
    %762 = vmatpush.xpose.msra.mxu0 0.0
    %v763 = vand.u32 %v143, 4294901760
    %764 = vmatpush.xpose.msra.mxu0 %v763
    %v765 = vand.u32 %v47, 4294901760
    %v766 = vsub.f32 %v47, %v765
    %v767 = vand.u32 %v766, 4294901760
    %768 = vmatmul.f32.gmra.mxu0 %v767
    %v769 = vpop.f32.mrf.mxu0
    %v770 = vadd.f32 %v591, %v769
    %v771 = vand.u32 %v50, 4294901760
    %v772 = vsub.f32 %v50, %v771
    %v773 = vand.u32 %v772, 4294901760
    %774 = vmatmul.f32.gmra.mxu0 %v773
    %v775 = vpop.f32.mrf.mxu0
    %v776 = vadd.f32 %v596, %v775
    %v777 = vand.u32 %v53, 4294901760
    %v778 = vsub.f32 %v53, %v777
    %v779 = vand.u32 %v778, 4294901760
    %780 = vmatmul.f32.gmra.mxu0 %v779
    %v781 = vpop.f32.mrf.mxu0
    %v782 = vadd.f32 %v601, %v781
    %v783 = vand.u32 %v56, 4294901760
    %v784 = vsub.f32 %v56, %v783
    %v785 = vand.u32 %v784, 4294901760
    %786 = vmatmul.f32.gmra.mxu0 %v785
    %v787 = vpop.f32.mrf.mxu0
    %v788 = vadd.f32 %v606, %v787
    %v789 = vand.u32 %v59, 4294901760
    %v790 = vsub.f32 %v59, %v789
    %v791 = vand.u32 %v790, 4294901760
    %792 = vmatmul.f32.gmra.mxu0 %v791
    %v793 = vpop.f32.mrf.mxu0
    %v794 = vadd.f32 %v611, %v793
    %v795 = vand.u32 %v62, 4294901760
    %v796 = vsub.f32 %v62, %v795
    %v797 = vand.u32 %v796, 4294901760
    %798 = vmatmul.f32.gmra.mxu0 %v797
    %v799 = vpop.f32.mrf.mxu0
    %v800 = vadd.f32 %v616, %v799
    %v801 = vand.u32 %v65, 4294901760
    %v802 = vsub.f32 %v65, %v801
    %v803 = vand.u32 %v802, 4294901760
    %804 = vmatmul.f32.gmra.mxu0 %v803
    %v805 = vpop.f32.mrf.mxu0
    %v806 = vadd.f32 %v621, %v805
    %v807 = vand.u32 %v68, 4294901760
    %v808 = vsub.f32 %v68, %v807
    %v809 = vand.u32 %v808, 4294901760
    %810 = vmatmul.f32.gmra.mxu0 %v809
    %v811 = vpop.f32.mrf.mxu0
    %v812 = vadd.f32 %v626, %v811
    %v813 = vand.u32 %v71, 4294901760
    %v814 = vsub.f32 %v71, %v813
    %v815 = vand.u32 %v814, 4294901760
    %816 = vmatmul.f32.gmra.mxu0 %v815
    %v817 = vpop.f32.mrf.mxu0
    %v818 = vadd.f32 %v631, %v817
    %v819 = vand.u32 %v74, 4294901760
    %v820 = vsub.f32 %v74, %v819
    %v821 = vand.u32 %v820, 4294901760
    %822 = vmatmul.f32.gmra.mxu0 %v821
    %v823 = vpop.f32.mrf.mxu0
    %v824 = vadd.f32 %v636, %v823
    %v825 = vand.u32 %v77, 4294901760
    %v826 = vsub.f32 %v77, %v825
    %v827 = vand.u32 %v826, 4294901760
    %828 = vmatmul.f32.gmra.mxu0 %v827
    %v829 = vpop.f32.mrf.mxu0
    %v830 = vadd.f32 %v641, %v829
    %v831 = vand.u32 %v80, 4294901760
    %v832 = vsub.f32 %v80, %v831
    %v833 = vand.u32 %v832, 4294901760
    %834 = vmatmul.f32.gmra.mxu0 %v833
    %v835 = vpop.f32.mrf.mxu0
    %v836 = vadd.f32 %v646, %v835
    %v837 = vand.u32 %v83, 4294901760
    %v838 = vsub.f32 %v83, %v837
    %v839 = vand.u32 %v838, 4294901760
    %840 = vmatmul.f32.gmra.mxu0 %v839
    %v841 = vpop.f32.mrf.mxu0
    %v842 = vadd.f32 %v651, %v841
    %v843 = vand.u32 %v86, 4294901760
    %v844 = vsub.f32 %v86, %v843
    %v845 = vand.u32 %v844, 4294901760
    %846 = vmatmul.f32.gmra.mxu0 %v845
    %v847 = vpop.f32.mrf.mxu0
    %v848 = vadd.f32 %v656, %v847
    %v849 = vand.u32 %v89, 4294901760
    %v850 = vsub.f32 %v89, %v849
    %v851 = vand.u32 %v850, 4294901760
    %852 = vmatmul.f32.gmra.mxu0 %v851
    %v853 = vpop.f32.mrf.mxu0
    %v854 = vadd.f32 %v661, %v853
    %v855 = vand.u32 %v92, 4294901760
    %v856 = vsub.f32 %v92, %v855
    %v857 = vand.u32 %v856, 4294901760
    %858 = vmatmul.f32.gmra.mxu0 %v857
    %v859 = vpop.f32.mrf.mxu0
    %v860 = vadd.f32 %v666, %v859
    %v861 = vand.u32 %v95, 4294901760
    %v862 = vsub.f32 %v95, %v861
    %v863 = vand.u32 %v862, 4294901760
    %864 = vmatmul.f32.gmra.mxu0 %v863
    %v865 = vpop.f32.mrf.mxu0
    %v866 = vadd.f32 %v671, %v865
    %v867 = vand.u32 %v98, 4294901760
    %v868 = vsub.f32 %v98, %v867
    %v869 = vand.u32 %v868, 4294901760
    %870 = vmatmul.f32.gmra.mxu0 %v869
    %v871 = vpop.f32.mrf.mxu0
    %v872 = vadd.f32 %v676, %v871
    %v873 = vand.u32 %v101, 4294901760
    %v874 = vsub.f32 %v101, %v873
    %v875 = vand.u32 %v874, 4294901760
    %876 = vmatmul.f32.gmra.mxu0 %v875
    %v877 = vpop.f32.mrf.mxu0
    %v878 = vadd.f32 %v681, %v877
    %v879 = vand.u32 %v104, 4294901760
    %v880 = vsub.f32 %v104, %v879
    %v881 = vand.u32 %v880, 4294901760
    %882 = vmatmul.f32.gmra.mxu0 %v881
    %v883 = vpop.f32.mrf.mxu0
    %v884 = vadd.f32 %v686, %v883
    %v885 = vand.u32 %v107, 4294901760
    %v886 = vsub.f32 %v107, %v885
    %v887 = vand.u32 %v886, 4294901760
    %888 = vmatmul.f32.gmra.mxu0 %v887
    %v889 = vpop.f32.mrf.mxu0
    %v890 = vadd.f32 %v691, %v889
    %v891 = vand.u32 %v110, 4294901760
    %v892 = vsub.f32 %v110, %v891
    %v893 = vand.u32 %v892, 4294901760
    %894 = vmatmul.f32.gmra.mxu0 %v893
    %v895 = vpop.f32.mrf.mxu0
    %v896 = vadd.f32 %v696, %v895
    %v897 = vand.u32 %v113, 4294901760
    %v898 = vsub.f32 %v113, %v897
    %v899 = vand.u32 %v898, 4294901760
    %900 = vmatmul.f32.gmra.mxu0 %v899
    %v901 = vpop.f32.mrf.mxu0
    %v902 = vadd.f32 %v701, %v901
    %v903 = vand.u32 %v116, 4294901760
    %v904 = vsub.f32 %v116, %v903
    %v905 = vand.u32 %v904, 4294901760
    %906 = vmatmul.f32.gmra.mxu0 %v905
    %v907 = vpop.f32.mrf.mxu0
    %v908 = vadd.f32 %v706, %v907
    %v909 = vand.u32 %v119, 4294901760
    %v910 = vsub.f32 %v119, %v909
    %v911 = vand.u32 %v910, 4294901760
    %912 = vmatmul.f32.gmra.mxu0 %v911
    %v913 = vpop.f32.mrf.mxu0
    %v914 = vadd.f32 %v711, %v913
    %v915 = vand.u32 %v122, 4294901760
    %v916 = vsub.f32 %v122, %v915
    %v917 = vand.u32 %v916, 4294901760
    %918 = vmatmul.f32.gmra.mxu0 %v917
    %v919 = vpop.f32.mrf.mxu0
    %v920 = vadd.f32 %v716, %v919
    %v921 = vand.u32 %v125, 4294901760
    %v922 = vsub.f32 %v125, %v921
    %v923 = vand.u32 %v922, 4294901760
    %924 = vmatmul.f32.gmra.mxu0 %v923
    %v925 = vpop.f32.mrf.mxu0
    %v926 = vadd.f32 %v721, %v925
    %v927 = vand.u32 %v128, 4294901760
    %v928 = vsub.f32 %v128, %v927
    %v929 = vand.u32 %v928, 4294901760
    %930 = vmatmul.f32.gmra.mxu0 %v929
    %v931 = vpop.f32.mrf.mxu0
    %v932 = vadd.f32 %v726, %v931
    %v933 = vand.u32 %v131, 4294901760
    %v934 = vsub.f32 %v131, %v933
    %v935 = vand.u32 %v934, 4294901760
    %936 = vmatmul.f32.gmra.mxu0 %v935
    %v937 = vpop.f32.mrf.mxu0
    %v938 = vadd.f32 %v731, %v937
    %v939 = vand.u32 %v134, 4294901760
    %v940 = vsub.f32 %v134, %v939
    %v941 = vand.u32 %v940, 4294901760
    %942 = vmatmul.f32.gmra.mxu0 %v941
    %v943 = vpop.f32.mrf.mxu0
    %v944 = vadd.f32 %v736, %v943
    %v945 = vand.u32 %v137, 4294901760
    %v946 = vsub.f32 %v137, %v945
    %v947 = vand.u32 %v946, 4294901760
    %948 = vmatmul.f32.gmra.mxu0 %v947
    %v949 = vpop.f32.mrf.mxu0
    %v950 = vadd.f32 %v741, %v949
    %v951 = vand.u32 %v140, 4294901760
    %v952 = vsub.f32 %v140, %v951
    %v953 = vand.u32 %v952, 4294901760
    %954 = vmatmul.f32.gmra.mxu0 %v953
    %v955 = vpop.f32.mrf.mxu0
    %v956 = vadd.f32 %v746, %v955
    %957 = vdwg.mxu0
    %958 = vmatpush.xpose.msra.mxu0 0.0
    %959 = vmatpush.xpose.msra.mxu0 0.0
    %960 = vmatpush.xpose.msra.mxu0 0.0
    %961 = vmatpush.xpose.msra.mxu0 0.0
    %962 = vmatpush.xpose.msra.mxu0 0.0
    %963 = vmatpush.xpose.msra.mxu0 0.0
    %964 = vmatpush.xpose.msra.mxu0 0.0
    %965 = vmatpush.xpose.msra.mxu0 0.0
    %966 = vmatpush.xpose.msra.mxu0 0.0
    %967 = vmatpush.xpose.msra.mxu0 0.0
    %968 = vmatpush.xpose.msra.mxu0 0.0
    %969 = vmatpush.xpose.msra.mxu0 0.0
    %970 = vmatpush.xpose.msra.mxu0 0.0
    %971 = vmatpush.xpose.msra.mxu0 0.0
    %972 = vmatpush.xpose.msra.mxu0 0.0
    %v973 = vand.u32 %v143, 4294901760
    %v974 = vsub.f32 %v143, %v973
    %v975 = vand.u32 %v974, 4294901760
    %976 = vmatpush.xpose.msra.mxu0 %v975
    %v977 = vand.u32 %v47, 4294901760
    %978 = vmatmul.f32.gmra.mxu0 %v977
    %v979 = vpop.f32.mrf.mxu0
    %v980 = vadd.f32 %v770, %v979
    %v981 = vand.u32 %v50, 4294901760
    %982 = vmatmul.f32.gmra.mxu0 %v981
    %v983 = vpop.f32.mrf.mxu0
    %v984 = vadd.f32 %v776, %v983
    %v985 = vand.u32 %v53, 4294901760
    %986 = vmatmul.f32.gmra.mxu0 %v985
    %v987 = vpop.f32.mrf.mxu0
    %v988 = vadd.f32 %v782, %v987
    %v989 = vand.u32 %v56, 4294901760
    %990 = vmatmul.f32.gmra.mxu0 %v989
    %v991 = vpop.f32.mrf.mxu0
    %v992 = vadd.f32 %v788, %v991
    %v993 = vand.u32 %v59, 4294901760
    %994 = vmatmul.f32.gmra.mxu0 %v993
    %v995 = vpop.f32.mrf.mxu0
    %v996 = vadd.f32 %v794, %v995
    %v997 = vand.u32 %v62, 4294901760
    %998 = vmatmul.f32.gmra.mxu0 %v997
    %v999 = vpop.f32.mrf.mxu0
    %v1000 = vadd.f32 %v800, %v999
    %v1001 = vand.u32 %v65, 4294901760
    %1002 = vmatmul.f32.gmra.mxu0 %v1001
    %v1003 = vpop.f32.mrf.mxu0
    %v1004 = vadd.f32 %v806, %v1003
    %v1005 = vand.u32 %v68, 4294901760
    %1006 = vmatmul.f32.gmra.mxu0 %v1005
    %v1007 = vpop.f32.mrf.mxu0
    %v1008 = vadd.f32 %v812, %v1007
    %v1009 = vand.u32 %v71, 4294901760
    %1010 = vmatmul.f32.gmra.mxu0 %v1009
    %v1011 = vpop.f32.mrf.mxu0
    %v1012 = vadd.f32 %v818, %v1011
    %v1013 = vand.u32 %v74, 4294901760
    %1014 = vmatmul.f32.gmra.mxu0 %v1013
    %v1015 = vpop.f32.mrf.mxu0
    %v1016 = vadd.f32 %v824, %v1015
    %v1017 = vand.u32 %v77, 4294901760
    %1018 = vmatmul.f32.gmra.mxu0 %v1017
    %v1019 = vpop.f32.mrf.mxu0
    %v1020 = vadd.f32 %v830, %v1019
    %v1021 = vand.u32 %v80, 4294901760
    %1022 = vmatmul.f32.gmra.mxu0 %v1021
    %v1023 = vpop.f32.mrf.mxu0
    %v1024 = vadd.f32 %v836, %v1023
    %v1025 = vand.u32 %v83, 4294901760
    %1026 = vmatmul.f32.gmra.mxu0 %v1025
    %v1027 = vpop.f32.mrf.mxu0
    %v1028 = vadd.f32 %v842, %v1027
    %v1029 = vand.u32 %v86, 4294901760
    %1030 = vmatmul.f32.gmra.mxu0 %v1029
    %v1031 = vpop.f32.mrf.mxu0
    %v1032 = vadd.f32 %v848, %v1031
    %v1033 = vand.u32 %v89, 4294901760
    %1034 = vmatmul.f32.gmra.mxu0 %v1033
    %v1035 = vpop.f32.mrf.mxu0
    %v1036 = vadd.f32 %v854, %v1035
    %v1037 = vand.u32 %v92, 4294901760
    %1038 = vmatmul.f32.gmra.mxu0 %v1037
    %v1039 = vpop.f32.mrf.mxu0
    %v1040 = vadd.f32 %v860, %v1039
    %v1041 = vand.u32 %v95, 4294901760
    %1042 = vmatmul.f32.gmra.mxu0 %v1041
    %v1043 = vpop.f32.mrf.mxu0
    %v1044 = vadd.f32 %v866, %v1043
    %v1045 = vand.u32 %v98, 4294901760
    %1046 = vmatmul.f32.gmra.mxu0 %v1045
    %v1047 = vpop.f32.mrf.mxu0
    %v1048 = vadd.f32 %v872, %v1047
    %v1049 = vand.u32 %v101, 4294901760
    %1050 = vmatmul.f32.gmra.mxu0 %v1049
    %v1051 = vpop.f32.mrf.mxu0
    %v1052 = vadd.f32 %v878, %v1051
    %v1053 = vand.u32 %v104, 4294901760
    %1054 = vmatmul.f32.gmra.mxu0 %v1053
    %v1055 = vpop.f32.mrf.mxu0
    %v1056 = vadd.f32 %v884, %v1055
    %v1057 = vand.u32 %v107, 4294901760
    %1058 = vmatmul.f32.gmra.mxu0 %v1057
    %v1059 = vpop.f32.mrf.mxu0
    %v1060 = vadd.f32 %v890, %v1059
    %v1061 = vand.u32 %v110, 4294901760
    %1062 = vmatmul.f32.gmra.mxu0 %v1061
    %v1063 = vpop.f32.mrf.mxu0
    %v1064 = vadd.f32 %v896, %v1063
    %v1065 = vand.u32 %v113, 4294901760
    %1066 = vmatmul.f32.gmra.mxu0 %v1065
    %v1067 = vpop.f32.mrf.mxu0
    %v1068 = vadd.f32 %v902, %v1067
    %v1069 = vand.u32 %v116, 4294901760
    %1070 = vmatmul.f32.gmra.mxu0 %v1069
    %v1071 = vpop.f32.mrf.mxu0
    %v1072 = vadd.f32 %v908, %v1071
    %v1073 = vand.u32 %v119, 4294901760
    %1074 = vmatmul.f32.gmra.mxu0 %v1073
    %v1075 = vpop.f32.mrf.mxu0
    %v1076 = vadd.f32 %v914, %v1075
    %v1077 = vand.u32 %v122, 4294901760
    %1078 = vmatmul.f32.gmra.mxu0 %v1077
    %v1079 = vpop.f32.mrf.mxu0
    %v1080 = vadd.f32 %v920, %v1079
    %v1081 = vand.u32 %v125, 4294901760
    %1082 = vmatmul.f32.gmra.mxu0 %v1081
    %v1083 = vpop.f32.mrf.mxu0
    %v1084 = vadd.f32 %v926, %v1083
    %v1085 = vand.u32 %v128, 4294901760
    %1086 = vmatmul.f32.gmra.mxu0 %v1085
    %v1087 = vpop.f32.mrf.mxu0
    %v1088 = vadd.f32 %v932, %v1087
    %v1089 = vand.u32 %v131, 4294901760
    %1090 = vmatmul.f32.gmra.mxu0 %v1089
    %v1091 = vpop.f32.mrf.mxu0
    %v1092 = vadd.f32 %v938, %v1091
    %v1093 = vand.u32 %v134, 4294901760
    %1094 = vmatmul.f32.gmra.mxu0 %v1093
    %v1095 = vpop.f32.mrf.mxu0
    %v1096 = vadd.f32 %v944, %v1095
    %v1097 = vand.u32 %v137, 4294901760
    %1098 = vmatmul.f32.gmra.mxu0 %v1097
    %v1099 = vpop.f32.mrf.mxu0
    %v1100 = vadd.f32 %v950, %v1099
    %v1101 = vand.u32 %v140, 4294901760
    %1102 = vmatmul.f32.gmra.mxu0 %v1101
    %v1103 = vpop.f32.mrf.mxu0
    %v1104 = vadd.f32 %v956, %v1103
    %1105 = vdwg.mxu0
    %1106 = vmatpush.xpose.msra.mxu0 0.0
    %1107 = vmatpush.xpose.msra.mxu0 0.0
    %1108 = vmatpush.xpose.msra.mxu0 0.0
    %1109 = vmatpush.xpose.msra.mxu0 0.0
    %1110 = vmatpush.xpose.msra.mxu0 0.0
    %1111 = vmatpush.xpose.msra.mxu0 0.0
    %1112 = vmatpush.xpose.msra.mxu0 0.0
    %1113 = vmatpush.xpose.msra.mxu0 0.0
    %1114 = vmatpush.xpose.msra.mxu0 0.0
    %1115 = vmatpush.xpose.msra.mxu0 0.0
    %1116 = vmatpush.xpose.msra.mxu0 0.0
    %1117 = vmatpush.xpose.msra.mxu0 0.0
    %1118 = vmatpush.xpose.msra.mxu0 0.0
    %1119 = vmatpush.xpose.msra.mxu0 0.0
    %1120 = vmatpush.xpose.msra.mxu0 0.0
    %v1121 = vand.u32 %v143, 4294901760
    %1122 = vmatpush.xpose.msra.mxu0 %v1121
    %v1123 = vand.u32 %v47, 4294901760
    %1124 = vmatmul.f32.gmra.mxu0 %v1123
    %v1125 = vpop.f32.mrf.mxu0
    %v1126 = vadd.f32 %v980, %v1125
    %v1127 = vand.u32 %v50, 4294901760
    %1128 = vmatmul.f32.gmra.mxu0 %v1127
    %v1129 = vpop.f32.mrf.mxu0
    %v1130 = vadd.f32 %v984, %v1129
    %v1131 = vand.u32 %v53, 4294901760
    %1132 = vmatmul.f32.gmra.mxu0 %v1131
    %v1133 = vpop.f32.mrf.mxu0
    %v1134 = vadd.f32 %v988, %v1133
    %v1135 = vand.u32 %v56, 4294901760
    %1136 = vmatmul.f32.gmra.mxu0 %v1135
    %v1137 = vpop.f32.mrf.mxu0
    %v1138 = vadd.f32 %v992, %v1137
    %v1139 = vand.u32 %v59, 4294901760
    %1140 = vmatmul.f32.gmra.mxu0 %v1139
    %v1141 = vpop.f32.mrf.mxu0
    %v1142 = vadd.f32 %v996, %v1141
    %v1143 = vand.u32 %v62, 4294901760
    %1144 = vmatmul.f32.gmra.mxu0 %v1143
    %v1145 = vpop.f32.mrf.mxu0
    %v1146 = vadd.f32 %v1000, %v1145
    %v1147 = vand.u32 %v65, 4294901760
    %1148 = vmatmul.f32.gmra.mxu0 %v1147
    %v1149 = vpop.f32.mrf.mxu0
    %v1150 = vadd.f32 %v1004, %v1149
    %v1151 = vand.u32 %v68, 4294901760
    %1152 = vmatmul.f32.gmra.mxu0 %v1151
    %v1153 = vpop.f32.mrf.mxu0
    %v1154 = vadd.f32 %v1008, %v1153
    %v1155 = vand.u32 %v71, 4294901760
    %1156 = vmatmul.f32.gmra.mxu0 %v1155
    %v1157 = vpop.f32.mrf.mxu0
    %v1158 = vadd.f32 %v1012, %v1157
    %v1159 = vand.u32 %v74, 4294901760
    %1160 = vmatmul.f32.gmra.mxu0 %v1159
    %v1161 = vpop.f32.mrf.mxu0
    %v1162 = vadd.f32 %v1016, %v1161
    %v1163 = vand.u32 %v77, 4294901760
    %1164 = vmatmul.f32.gmra.mxu0 %v1163
    %v1165 = vpop.f32.mrf.mxu0
    %v1166 = vadd.f32 %v1020, %v1165
    %v1167 = vand.u32 %v80, 4294901760
    %1168 = vmatmul.f32.gmra.mxu0 %v1167
    %v1169 = vpop.f32.mrf.mxu0
    %v1170 = vadd.f32 %v1024, %v1169
    %v1171 = vand.u32 %v83, 4294901760
    %1172 = vmatmul.f32.gmra.mxu0 %v1171
    %v1173 = vpop.f32.mrf.mxu0
    %v1174 = vadd.f32 %v1028, %v1173
    %v1175 = vand.u32 %v86, 4294901760
    %1176 = vmatmul.f32.gmra.mxu0 %v1175
    %v1177 = vpop.f32.mrf.mxu0
    %v1178 = vadd.f32 %v1032, %v1177
    %v1179 = vand.u32 %v89, 4294901760
    %1180 = vmatmul.f32.gmra.mxu0 %v1179
    %v1181 = vpop.f32.mrf.mxu0
    %v1182 = vadd.f32 %v1036, %v1181
    %v1183 = vand.u32 %v92, 4294901760
    %1184 = vmatmul.f32.gmra.mxu0 %v1183
    %v1185 = vpop.f32.mrf.mxu0
    %v1186 = vadd.f32 %v1040, %v1185
    %v1187 = vand.u32 %v95, 4294901760
    %1188 = vmatmul.f32.gmra.mxu0 %v1187
    %v1189 = vpop.f32.mrf.mxu0
    %v1190 = vadd.f32 %v1044, %v1189
    %v1191 = vand.u32 %v98, 4294901760
    %1192 = vmatmul.f32.gmra.mxu0 %v1191
    %v1193 = vpop.f32.mrf.mxu0
    %v1194 = vadd.f32 %v1048, %v1193
    %v1195 = vand.u32 %v101, 4294901760
    %1196 = vmatmul.f32.gmra.mxu0 %v1195
    %v1197 = vpop.f32.mrf.mxu0
    %v1198 = vadd.f32 %v1052, %v1197
    %v1199 = vand.u32 %v104, 4294901760
    %1200 = vmatmul.f32.gmra.mxu0 %v1199
    %v1201 = vpop.f32.mrf.mxu0
    %v1202 = vadd.f32 %v1056, %v1201
    %v1203 = vand.u32 %v107, 4294901760
    %1204 = vmatmul.f32.gmra.mxu0 %v1203
    %v1205 = vpop.f32.mrf.mxu0
    %v1206 = vadd.f32 %v1060, %v1205
    %v1207 = vand.u32 %v110, 4294901760
    %1208 = vmatmul.f32.gmra.mxu0 %v1207
    %v1209 = vpop.f32.mrf.mxu0
    %v1210 = vadd.f32 %v1064, %v1209
    %v1211 = vand.u32 %v113, 4294901760
    %1212 = vmatmul.f32.gmra.mxu0 %v1211
    %v1213 = vpop.f32.mrf.mxu0
    %v1214 = vadd.f32 %v1068, %v1213
    %v1215 = vand.u32 %v116, 4294901760
    %1216 = vmatmul.f32.gmra.mxu0 %v1215
    %v1217 = vpop.f32.mrf.mxu0
    %v1218 = vadd.f32 %v1072, %v1217
    %v1219 = vand.u32 %v119, 4294901760
    %1220 = vmatmul.f32.gmra.mxu0 %v1219
    %v1221 = vpop.f32.mrf.mxu0
    %v1222 = vadd.f32 %v1076, %v1221
    %v1223 = vand.u32 %v122, 4294901760
    %1224 = vmatmul.f32.gmra.mxu0 %v1223
    %v1225 = vpop.f32.mrf.mxu0
    %v1226 = vadd.f32 %v1080, %v1225
    %v1227 = vand.u32 %v125, 4294901760
    %1228 = vmatmul.f32.gmra.mxu0 %v1227
    %v1229 = vpop.f32.mrf.mxu0
    %v1230 = vadd.f32 %v1084, %v1229
    %v1231 = vand.u32 %v128, 4294901760
    %1232 = vmatmul.f32.gmra.mxu0 %v1231
    %v1233 = vpop.f32.mrf.mxu0
    %v1234 = vadd.f32 %v1088, %v1233
    %v1235 = vand.u32 %v131, 4294901760
    %1236 = vmatmul.f32.gmra.mxu0 %v1235
    %v1237 = vpop.f32.mrf.mxu0
    %v1238 = vadd.f32 %v1092, %v1237
    %v1239 = vand.u32 %v134, 4294901760
    %1240 = vmatmul.f32.gmra.mxu0 %v1239
    %v1241 = vpop.f32.mrf.mxu0
    %v1242 = vadd.f32 %v1096, %v1241
    %v1243 = vand.u32 %v137, 4294901760
    %1244 = vmatmul.f32.gmra.mxu0 %v1243
    %v1245 = vpop.f32.mrf.mxu0
    %v1246 = vadd.f32 %v1100, %v1245
    %v1247 = vand.u32 %v140, 4294901760
    %1248 = vmatmul.f32.gmra.mxu0 %v1247
    %v1249 = vpop.f32.mrf.mxu0
    %v1250 = vadd.f32 %v1104, %v1249
    %1251 = vdwg.mxu0
    %v1252 = vsel %vm45, %v1126, -inf
    %v1253 = vsel %vm45, %v1130, -inf
    %v1254 = vsel %vm45, %v1134, -inf
    %v1255 = vmax.f32 %v1252, %v1254
    %v1256 = vsel %vm45, %v1138, -inf
    %v1257 = vmax.f32 %v1253, %v1256
    %v1258 = vsel %vm45, %v1142, -inf
    %v1259 = vmax.f32 %v1255, %v1258
    %v1260 = vsel %vm45, %v1146, -inf
    %v1261 = vmax.f32 %v1257, %v1260
    %v1262 = vsel %vm45, %v1150, -inf
    %v1263 = vmax.f32 %v1259, %v1262
    %v1264 = vsel %vm45, %v1154, -inf
    %v1265 = vmax.f32 %v1261, %v1264
    %v1266 = vsel %vm45, %v1158, -inf
    %v1267 = vmax.f32 %v1263, %v1266
    %v1268 = vsel %vm45, %v1162, -inf
    %v1269 = vmax.f32 %v1265, %v1268
    %v1270 = vsel %vm45, %v1166, -inf
    %v1271 = vmax.f32 %v1267, %v1270
    %v1272 = vsel %vm45, %v1170, -inf
    %v1273 = vmax.f32 %v1269, %v1272
    %v1274 = vsel %vm45, %v1174, -inf
    %v1275 = vmax.f32 %v1271, %v1274
    %v1276 = vsel %vm45, %v1178, -inf
    %v1277 = vmax.f32 %v1273, %v1276
    %v1278 = vsel %vm45, %v1182, -inf
    %v1279 = vmax.f32 %v1275, %v1278
    %v1280 = vsel %vm45, %v1186, -inf
    %v1281 = vmax.f32 %v1277, %v1280
    %v1282 = vmax.f32 %v1279, %v1281
    %v1283 = vrot.slane %v1282, 4
    %v1284 = vmax.f32 %v1282, %v1283
    %v1285 = vrot.slane %v1284, 2
    %v1286 = vmax.f32 %v1284, %v1285
    %v1287 = vrot.slane %v1286, 1
    %v1288 = vmax.f32 %v1286, %v1287
    %v1289 = vsel %vm45, %v1190, -inf
    %v1290 = vsel %vm45, %v1194, -inf
    %v1291 = vsel %vm45, %v1198, -inf
    %v1292 = vmax.f32 %v1289, %v1291
    %v1293 = vsel %vm45, %v1202, -inf
    %v1294 = vmax.f32 %v1290, %v1293
    %v1295 = vsel %vm45, %v1206, -inf
    %v1296 = vmax.f32 %v1292, %v1295
    %v1297 = vsel %vm45, %v1210, -inf
    %v1298 = vmax.f32 %v1294, %v1297
    %v1299 = vsel %vm45, %v1214, -inf
    %v1300 = vmax.f32 %v1296, %v1299
    %v1301 = vsel %vm45, %v1218, -inf
    %v1302 = vmax.f32 %v1298, %v1301
    %v1303 = vsel %vm45, %v1222, -inf
    %v1304 = vmax.f32 %v1300, %v1303
    %v1305 = vsel %vm45, %v1226, -inf
    %v1306 = vmax.f32 %v1302, %v1305
    %v1307 = vsel %vm45, %v1230, -inf
    %v1308 = vmax.f32 %v1304, %v1307
    %v1309 = vsel %vm45, %v1234, -inf
    %v1310 = vmax.f32 %v1306, %v1309
    %v1311 = vsel %vm45, %v1238, -inf
    %v1312 = vmax.f32 %v1308, %v1311
    %v1313 = vsel %vm45, %v1242, -inf
    %v1314 = vmax.f32 %v1310, %v1313
    %v1315 = vsel %vm45, %v1246, -inf
    %v1316 = vmax.f32 %v1312, %v1315
    %v1317 = vsel %vm45, %v1250, -inf
    %v1318 = vmax.f32 %v1314, %v1317
    %v1319 = vmax.f32 %v1316, %v1318
    %v1320 = vrot.slane %v1319, 4
    %v1321 = vmax.f32 %v1319, %v1320
    %v1322 = vrot.slane %v1321, 2
    %v1323 = vmax.f32 %v1321, %v1322
    %v1324 = vrot.slane %v1323, 1
    %v1325 = vmax.f32 %v1323, %v1324
    %v1326 = vlaneseq
    %v1327 = vshrl.u32 %v1326, 7
    %v1328 = vadd.s32 %v1327, 8
    %v1329 = vadd.s32 %v1327, 16
    %v1330 = vadd.s32 %v1327, 24
    %v1331 = vadd.s32 %v1327, 32
    %v1332 = vadd.s32 %v1327, 40
    %v1333 = vadd.s32 %v1327, 48
    %v1334 = vadd.s32 %v1327, 56
    %v1335 = vadd.s32 %v1327, 64
    %v1336 = vadd.s32 %v1327, 72
    %v1337 = vadd.s32 %v1327, 80
    %v1338 = vadd.s32 %v1327, 88
    %v1339 = vadd.s32 %v1327, 96
    %v1340 = vadd.s32 %v1327, 104
    %v1341 = vadd.s32 %v1327, 112
    %v1342 = vadd.s32 %v1327, 120
    %vm1343 = vcmp.eq.f32.partialorder %v1126, %v1288
    %vm1344 = vcmp.eq.f32.partialorder %v1130, %v1288
    %vm1345 = vcmp.eq.f32.partialorder %v1134, %v1288
    %vm1346 = vcmp.eq.f32.partialorder %v1138, %v1288
    %vm1347 = vcmp.eq.f32.partialorder %v1142, %v1288
    %vm1348 = vcmp.eq.f32.partialorder %v1146, %v1288
    %vm1349 = vcmp.eq.f32.partialorder %v1150, %v1288
    %vm1350 = vcmp.eq.f32.partialorder %v1154, %v1288
    %vm1351 = vcmp.eq.f32.partialorder %v1158, %v1288
    %vm1352 = vcmp.eq.f32.partialorder %v1162, %v1288
    %vm1353 = vcmp.eq.f32.partialorder %v1166, %v1288
    %vm1354 = vcmp.eq.f32.partialorder %v1170, %v1288
    %vm1355 = vcmp.eq.f32.partialorder %v1174, %v1288
    %vm1356 = vcmp.eq.f32.partialorder %v1178, %v1288
    %vm1357 = vcmp.eq.f32.partialorder %v1182, %v1288
    %vm1358 = vcmp.eq.f32.partialorder %v1186, %v1288
    %vm1359 = vcmp.eq.f32.partialorder %v1190, %v1325
    %vm1360 = vcmp.eq.f32.partialorder %v1194, %v1325
    %vm1361 = vcmp.eq.f32.partialorder %v1198, %v1325
    %vm1362 = vcmp.eq.f32.partialorder %v1202, %v1325
    %vm1363 = vcmp.eq.f32.partialorder %v1206, %v1325
    %vm1364 = vcmp.eq.f32.partialorder %v1210, %v1325
    %vm1365 = vcmp.eq.f32.partialorder %v1214, %v1325
    %vm1366 = vcmp.eq.f32.partialorder %v1218, %v1325
    %vm1367 = vcmp.eq.f32.partialorder %v1222, %v1325
    %vm1368 = vcmp.eq.f32.partialorder %v1226, %v1325
    %vm1369 = vcmp.eq.f32.partialorder %v1230, %v1325
    %vm1370 = vcmp.eq.f32.partialorder %v1234, %v1325
    %vm1371 = vcmp.eq.f32.partialorder %v1238, %v1325
    %vm1372 = vcmp.eq.f32.partialorder %v1242, %v1325
    %vm1373 = vcmp.eq.f32.partialorder %v1246, %v1325
    %vm1374 = vcmp.eq.f32.partialorder %v1250, %v1325
    %v1375 = vsel %vm1343, %v1327, 128
    %v1376 = vsel %vm1344, %v1328, 128
    %v1377 = vsel %vm1345, %v1329, 128
    %v1378 = vsel %vm1346, %v1330, 128
    %v1379 = vsel %vm1347, %v1331, 128
    %v1380 = vsel %vm1348, %v1332, 128
    %v1381 = vsel %vm1349, %v1333, 128
    %v1382 = vsel %vm1350, %v1334, 128
    %v1383 = vsel %vm1351, %v1335, 128
    %v1384 = vsel %vm1352, %v1336, 128
    %v1385 = vsel %vm1353, %v1337, 128
    %v1386 = vsel %vm1354, %v1338, 128
    %v1387 = vsel %vm1355, %v1339, 128
    %v1388 = vsel %vm1356, %v1340, 128
    %v1389 = vsel %vm1357, %v1341, 128
    %v1390 = vsel %vm1358, %v1342, 128
    %v1391 = vsel %vm1359, %v1327, 128
    %v1392 = vsel %vm1360, %v1328, 128
    %v1393 = vsel %vm1361, %v1329, 128
    %v1394 = vsel %vm1362, %v1330, 128
    %v1395 = vsel %vm1363, %v1331, 128
    %v1396 = vsel %vm1364, %v1332, 128
    %v1397 = vsel %vm1365, %v1333, 128
    %v1398 = vsel %vm1366, %v1334, 128
    %v1399 = vsel %vm1367, %v1335, 128
    %v1400 = vsel %vm1368, %v1336, 128
    %v1401 = vsel %vm1369, %v1337, 128
    %v1402 = vsel %vm1370, %v1338, 128
    %v1403 = vsel %vm1371, %v1339, 128
    %v1404 = vsel %vm1372, %v1340, 128
    %v1405 = vsel %vm1373, %v1341, 128
    %v1406 = vsel %vm1374, %v1342, 128
    %v1407 = vsel %vm45, %v1375, 2147483647
    %v1408 = vsel %vm45, %v1376, 2147483647
    %v1409 = vsel %vm45, %v1377, 2147483647
    %vm1410 = vcmp.lt.s32.totalorder %v1407, %v1409
    %v1411 = vsel %vm1410, %v1407, %v1409
    %v1412 = vsel %vm45, %v1378, 2147483647
    %vm1413 = vcmp.lt.s32.totalorder %v1408, %v1412
    %v1414 = vsel %vm1413, %v1408, %v1412
    %v1415 = vsel %vm45, %v1379, 2147483647
    %vm1416 = vcmp.lt.s32.totalorder %v1411, %v1415
    %v1417 = vsel %vm1416, %v1411, %v1415
    %v1418 = vsel %vm45, %v1380, 2147483647
    %vm1419 = vcmp.lt.s32.totalorder %v1414, %v1418
    %v1420 = vsel %vm1419, %v1414, %v1418
    %v1421 = vsel %vm45, %v1381, 2147483647
    %vm1422 = vcmp.lt.s32.totalorder %v1417, %v1421
    %v1423 = vsel %vm1422, %v1417, %v1421
    %v1424 = vsel %vm45, %v1382, 2147483647
    %vm1425 = vcmp.lt.s32.totalorder %v1420, %v1424
    %v1426 = vsel %vm1425, %v1420, %v1424
    %v1427 = vsel %vm45, %v1383, 2147483647
    %vm1428 = vcmp.lt.s32.totalorder %v1423, %v1427
    %v1429 = vsel %vm1428, %v1423, %v1427
    %v1430 = vsel %vm45, %v1384, 2147483647
    %vm1431 = vcmp.lt.s32.totalorder %v1426, %v1430
    %v1432 = vsel %vm1431, %v1426, %v1430
    %v1433 = vsel %vm45, %v1385, 2147483647
    %vm1434 = vcmp.lt.s32.totalorder %v1429, %v1433
    %v1435 = vsel %vm1434, %v1429, %v1433
    %v1436 = vsel %vm45, %v1386, 2147483647
    %vm1437 = vcmp.lt.s32.totalorder %v1432, %v1436
    %v1438 = vsel %vm1437, %v1432, %v1436
    %v1439 = vsel %vm45, %v1387, 2147483647
    %vm1440 = vcmp.lt.s32.totalorder %v1435, %v1439
    %v1441 = vsel %vm1440, %v1435, %v1439
    %v1442 = vsel %vm45, %v1388, 2147483647
    %vm1443 = vcmp.lt.s32.totalorder %v1438, %v1442
    %v1444 = vsel %vm1443, %v1438, %v1442
    %v1445 = vsel %vm45, %v1389, 2147483647
    %vm1446 = vcmp.lt.s32.totalorder %v1441, %v1445
    %v1447 = vsel %vm1446, %v1441, %v1445
    %v1448 = vsel %vm45, %v1390, 2147483647
    %vm1449 = vcmp.lt.s32.totalorder %v1444, %v1448
    %v1450 = vsel %vm1449, %v1444, %v1448
    %vm1451 = vcmp.lt.s32.totalorder %v1447, %v1450
    %v1452 = vsel %vm1451, %v1447, %v1450
    %v1453 = vrot.slane %v1452, 4
    %vm1454 = vcmp.lt.s32.totalorder %v1452, %v1453
    %v1455 = vsel %vm1454, %v1452, %v1453
    %v1456 = vrot.slane %v1455, 2
    %vm1457 = vcmp.lt.s32.totalorder %v1455, %v1456
    %v1458 = vsel %vm1457, %v1455, %v1456
    %v1459 = vrot.slane %v1458, 1
    %vm1460 = vcmp.lt.s32.totalorder %v1458, %v1459
    %v1461 = vsel %vm1460, %v1458, %v1459
    %v1462 = vsel %vm45, %v1391, 2147483647
    %v1463 = vsel %vm45, %v1392, 2147483647
    %v1464 = vsel %vm45, %v1393, 2147483647
    %vm1465 = vcmp.lt.s32.totalorder %v1462, %v1464
    %v1466 = vsel %vm1465, %v1462, %v1464
    %v1467 = vsel %vm45, %v1394, 2147483647
    %vm1468 = vcmp.lt.s32.totalorder %v1463, %v1467
    %v1469 = vsel %vm1468, %v1463, %v1467
    %v1470 = vsel %vm45, %v1395, 2147483647
    %vm1471 = vcmp.lt.s32.totalorder %v1466, %v1470
    %v1472 = vsel %vm1471, %v1466, %v1470
    %v1473 = vsel %vm45, %v1396, 2147483647
    %vm1474 = vcmp.lt.s32.totalorder %v1469, %v1473
    %v1475 = vsel %vm1474, %v1469, %v1473
    %v1476 = vsel %vm45, %v1397, 2147483647
    %vm1477 = vcmp.lt.s32.totalorder %v1472, %v1476
    %v1478 = vsel %vm1477, %v1472, %v1476
    %v1479 = vsel %vm45, %v1398, 2147483647
    %vm1480 = vcmp.lt.s32.totalorder %v1475, %v1479
    %v1481 = vsel %vm1480, %v1475, %v1479
    %v1482 = vsel %vm45, %v1399, 2147483647
    %vm1483 = vcmp.lt.s32.totalorder %v1478, %v1482
    %v1484 = vsel %vm1483, %v1478, %v1482
    %v1485 = vsel %vm45, %v1400, 2147483647
    %vm1486 = vcmp.lt.s32.totalorder %v1481, %v1485
    %v1487 = vsel %vm1486, %v1481, %v1485
    %v1488 = vsel %vm45, %v1401, 2147483647
    %vm1489 = vcmp.lt.s32.totalorder %v1484, %v1488
    %v1490 = vsel %vm1489, %v1484, %v1488
    %v1491 = vsel %vm45, %v1402, 2147483647
    %vm1492 = vcmp.lt.s32.totalorder %v1487, %v1491
    %v1493 = vsel %vm1492, %v1487, %v1491
    %v1494 = vsel %vm45, %v1403, 2147483647
    %vm1495 = vcmp.lt.s32.totalorder %v1490, %v1494
    %v1496 = vsel %vm1495, %v1490, %v1494
    %v1497 = vsel %vm45, %v1404, 2147483647
    %vm1498 = vcmp.lt.s32.totalorder %v1493, %v1497
    %v1499 = vsel %vm1498, %v1493, %v1497
    %v1500 = vsel %vm45, %v1405, 2147483647
    %vm1501 = vcmp.lt.s32.totalorder %v1496, %v1500
    %v1502 = vsel %vm1501, %v1496, %v1500
    %v1503 = vsel %vm45, %v1406, 2147483647
    %vm1504 = vcmp.lt.s32.totalorder %v1499, %v1503
    %v1505 = vsel %vm1504, %v1499, %v1503
    %vm1506 = vcmp.lt.s32.totalorder %v1502, %v1505
    %v1507 = vsel %vm1506, %v1502, %v1505
    %v1508 = vrot.slane %v1507, 4
    %vm1509 = vcmp.lt.s32.totalorder %v1507, %v1508
    %v1510 = vsel %vm1509, %v1507, %v1508
    %v1511 = vrot.slane %v1510, 2
    %vm1512 = vcmp.lt.s32.totalorder %v1510, %v1511
    %v1513 = vsel %vm1512, %v1510, %v1511
    %v1514 = vrot.slane %v1513, 1
    %vm1515 = vcmp.lt.s32.totalorder %v1513, %v1514
    %v1516 = vsel %vm1515, %v1513, %v1514
    %vm1517 = vcmask 57344
    %1518 = vst.msk [vmem:[#allocation2] sm:$0x1] %vm1517, %v1461
    %1519 = vst.msk [vmem:[#allocation2 + $0x1] sm:$0x1] %vm1517, %v1516
    // Predicated region
    $region10: #{tpu_custom_call.1} parent=1 // pred_check
      _
    $region11: #{tpu_custom_call.1} parent=1 // pred_check_branch
      %1521 = sbr.rel (0) target = $region13
    $region12: #{tpu_custom_call.1} parent=1 // pred_region
      %1523 = vsyncadd [#allocation3], 0
      %s1524 = sshll.u32 [#allocation2], 4
      %s1525 = int_to_ptr.vmem [resolvable:$true] %s1524
      %s1526 = sshll.u32 %s2, 4
      %s1527 = int_to_ptr.hbm [resolvable:$true] %s1526
      %1532 = dma.vmem_to_hbm [thread:$0]  %s1525, 32, %s1527, [#allocation3], 16, 16, 1
    $region13: #{tpu_custom_call.1} parent=1 // pred_fallthru
      _
    // Predicated region
    $region14: #{tpu_custom_call.1} parent=1 // pred_check
      _
    $region15: #{tpu_custom_call.1} parent=1 // pred_check_branch
      %1534 = sbr.rel (0) target = $region17
    $region16: #{tpu_custom_call.1} parent=1 // pred_region
      %1536 = dma.done [#allocation3], 32
    $region17: #{tpu_custom_call.1} parent=1 // pred_fallthru
      _
    %1537 = vsyncpa [#allocation3], 1

</llo_original>
